<compile_context>
chip_gen: v6e
topology: v6e:2x2x1
jax: 0.10.0
libtpu: 0.0.40
codegen_flags: <defaults>
</compile_context>

<pallas_src>
import math

import jax
import jax.numpy as jnp
import numpy as np
from jax.experimental import pallas as pl
from jax.experimental.pallas import tpu as pltpu

# ---- fixed loss hyper-parameters (deterministic "init", nnU-Net defaults) ----
WEIGHT_CE = 1.0
WEIGHT_DICE = 1.0
SMOOTH = 1e-5        # soft_dice_kwargs['smooth']


def _dc_ce_kernel(logits_ref, tgt_ref, tp_ref, psum_ref, cnt_ref, ce_ref):
    """One (B, C, R, 128) spatial tile: softmax + Dice-stat / CE elementwise accumulation."""

    @pl.when(pl.program_id(1) == 0)
    def _init():
        tp_ref[...] = jnp.zeros_like(tp_ref)
        psum_ref[...] = jnp.zeros_like(psum_ref)
        cnt_ref[...] = jnp.zeros_like(cnt_ref)
        ce_ref[...] = jnp.zeros_like(ce_ref)

    x = logits_ref[...].astype(jnp.float32)          # (B, C, R, 128) cast in-kernel
    tgt = tgt_ref[...].astype(jnp.int32)             # (B, 1, R, 128) int8 -> int32
    B, C, R, L = x.shape

    # numerically-stable softmax over the channel axis (major axis -> pure VPU ops)
    m = jnp.max(x, axis=1, keepdims=True)            # (B, 1, R, 128)
    shifted = x - m
    e = jnp.exp(shifted)                             # EUP
    z = jnp.sum(e, axis=1, keepdims=True)            # (B, 1, R, 128)
    probs = e * pl.reciprocal(z, approx=True)        # EUP approx reciprocal

    # one masked one-hot, reused for tp, class counts and the CE target logit
    cls = jax.lax.broadcasted_iota(jnp.int32, (B, C, R, L), 1)
    onehot = jnp.where(cls == tgt, 1.0, 0.0)         # (B, C, R, 128) f32

    def fold(v):  # (B, C, R, 128) -> (B, C, 8, 128): elementwise vreg adds only
        return v.reshape(B, C, R // 8, 8, L).sum(axis=2)

    tp_ref[...] += fold(probs * onehot)              # sum probs at target class
    psum_ref[...] += fold(probs)                     # sum of probs per class
    cnt_ref[...] += fold(onehot)                     # per-class pixel counts

    # cross-entropy partial:  logsumexp - logits[target] = log(z) - shifted[target]
    logit_t = jnp.sum(shifted * onehot, axis=1)      # (B, R, 128)
    ce_term = jnp.log(z)[:, 0] - logit_t             # (B, R, 128)
    ce_ref[...] += ce_term.reshape(B, R // 8, 8, L).sum(axis=(0, 1))


def _plan_tiling(S, B, C, in_itemsize):
    """Pick (nshards, blocks_per_shard, rows_per_block, rows_padded, vmem_limit)."""
    num_rows = -(-S // 128)
    # Per 128-lane spatial row: 2x double-buffered logits block + 2x double-buffered
    # int8 target block + ~5 tile-sized f32 temporaries created in-kernel.
    per_row = B * C * 128 * (2 * in_itemsize + 5 * 4) + 2 * B * 128
    budget = 20 * 1024 * 1024          # keeps the total comfortably under v7x's 64 MiB VMEM
    r_max = max(32, (budget // per_row) // 32 * 32)

    if num_rows < 64 and num_rows <= r_max:
        # Tiny problem: one shard, one full-array block.
        rows_padded = -(-num_rows // 8) * 8           # fold wants a multiple of 8 rows
        nshards, bps, r_blk = 1, 1, rows_padded
    else:
        nshards = 2                                   # one shard per TensorCore on v7x
        rows_per_shard = -(-num_rows // nshards)
        best = None
        for r_c in range(32, r_max + 1, 32):          # 32-row steps: int8-tile aligned
            bps_c = -(-rows_per_shard // r_c)
            key = (nshards * bps_c * r_c, bps_c)      # least padding, then biggest blocks
            if best is None or key < best[0]:
                best = (key, r_c, bps_c)
        _, r_blk, bps = best
        rows_padded = nshards * bps * r_blk

    vmem_limit = int(min(max(2 * r_blk * per_row, 16 << 20), 48 << 20))
    return nshards, bps, r_blk, rows_padded, vmem_limit


@jax.jit
def dc_and_ce_loss(net_output, target):
    """net_output: (B, C, H, W) logits (f32/bf16); target: (B, 1, H, W) integer labels."""
    B, C, H, W = net_output.shape
    S = H * W

    nshards, bps, R, rows_padded, vmem_limit = _plan_tiling(
        S, B, C, jnp.dtype(net_output.dtype).itemsize)
    s_pad = rows_padded * 128
    n_pad = s_pad - S

    logits = net_output.reshape(B, C, S)              # keep HBM dtype (bf16 stays bf16)
    tgt = target.reshape(B, 1, S)
    if jnp.dtype(tgt.dtype).itemsize != 1:
        tgt = tgt.astype(jnp.int8)                    # labels < C <= 127
    if n_pad:
        # Zero pad; its closed-form contribution is removed in the combine below.
        logits = jnp.pad(logits, ((0, 0), (0, 0), (0, n_pad)))
        tgt = jnp.pad(tgt, ((0, 0), (0, 0), (0, n_pad)))
    logits = logits.reshape(B, C, rows_padded, 128)
    tgt = tgt.reshape(B, 1, rows_padded, 128)

    stat_shape = jax.ShapeDtypeStruct((nshards * B, C, 8, 128), jnp.float32)
    tp_p, ps_p, cnt_p, ce_p = pl.pallas_call(
        _dc_ce_kernel,
        out_shape=(stat_shape, stat_shape, stat_shape,
                   jax.ShapeDtypeStruct((nshards * 8, 128), jnp.float32)),
        grid=(nshards, bps),
        in_specs=[
            pl.BlockSpec((B, C, R, 128), lambda sh, t: (0, 0, sh * bps + t, 0)),
            pl.BlockSpec((B, 1, R, 128), lambda sh, t: (0, 0, sh * bps + t, 0)),
        ],
        out_specs=(
            pl.BlockSpec((B, C, 8, 128), lambda sh, t: (sh, 0, 0, 0)),
            pl.BlockSpec((B, C, 8, 128), lambda sh, t: (sh, 0, 0, 0)),
            pl.BlockSpec((B, C, 8, 128), lambda sh, t: (sh, 0, 0, 0)),
            pl.BlockSpec((8, 128), lambda sh, t: (sh, 0)),
        ),
        compiler_params=pltpu.CompilerParams(
            dimension_semantics=("parallel", "arbitrary"),
            vmem_limit_bytes=vmem_limit),
    )(logits, tgt)

    # ---- tiny final combine in plain JAX (merges the per-TC shards on v7x) ----
    tp = tp_p.reshape(nshards, B, C, 8 * 128).sum(axis=(0, 3))
    psum = ps_p.reshape(nshards, B, C, 8 * 128).sum(axis=(0, 3))
    cnt = cnt_p.reshape(nshards, B, C, 8 * 128).sum(axis=(0, 3))
    ce_sum = ce_p.sum()

    if n_pad:
        # Padded columns have all-zero logits (softmax = 1/C) and label 0.
        psum = psum - n_pad / C
        tp = tp.at[:, 0].add(-n_pad / C)
        cnt = cnt.at[:, 0].add(-float(n_pad))
        ce_sum = ce_sum - B * n_pad * math.log(C)

    # 2tp + fp + fn == sum(probs) + count  (fp = psum - tp, fn = cnt - tp)
    denom = jnp.maximum(psum + cnt + SMOOTH, 1e-8)
    dc = (2.0 * tp + SMOOTH) / denom                   # (B, C) soft dice per class
    dc_loss = -jnp.mean(dc[:, 1:]) if C > 1 else jnp.float32(0.0)   # do_bg=False
    ce_loss = ce_sum / (B * S)
    return (WEIGHT_CE * ce_loss + WEIGHT_DICE * dc_loss).astype(jnp.float32)


def _reference(net_output, target):
    """Pure-JAX replica of the PyTorch forward for validation."""
    B, C, H, W = net_output.shape
    x = net_output.astype(jnp.float32)
    probs = jax.nn.softmax(x, axis=1)
    onehot = jax.nn.one_hot(target[:, 0], C, dtype=jnp.float32).transpose(0, 3, 1, 2)
    axes = (2, 3)
    tp = jnp.sum(probs * onehot, axis=axes)
    fp = jnp.sum(probs * (1.0 - onehot), axis=axes)
    fn = jnp.sum((1.0 - probs) * onehot, axis=axes)
    dc = (2 * tp + SMOOTH) / jnp.maximum(2 * tp + fp + fn + SMOOTH, 1e-8)
    dc_loss = -jnp.mean(dc[:, 1:])
    logp = jax.nn.log_softmax(x, axis=1)
    ce = -jnp.mean(jnp.sum(logp * onehot, axis=1))
    return WEIGHT_CE * ce + WEIGHT_DICE * dc_loss


if __name__ == "__main__":
    key = jax.random.PRNGKey(0)
    k1, k2 = jax.random.split(key)
    B, C, H, W = 2, 4, 16, 16
    net_output = jax.random.normal(k1, (B, C, H, W), dtype=jnp.float32)
    target = jax.random.randint(k2, (B, 1, H, W), 0, C, dtype=jnp.int32)

    loss = dc_and_ce_loss(net_output, target)
    jax.block_until_ready(loss)

    ref = _reference(net_output, target)
    assert np.allclose(np.asarray(loss), np.asarray(ref), rtol=2e-3, atol=1e-4), (
        f"mismatch: pallas={float(loss)} ref={float(ref)}"
    )
    print("KERNEL_OK")
</pallas_src>

<mosaic_0001>
module attributes {stable_mosaic.version = 11 : i64} {
  func.func @_dc_ce_kernel(%arg0: i32, %arg1: i32, %arg2: memref<2x4x8x128xf32, #tpu.memory_space<vmem>>, %arg3: memref<2x1x8x128xi8, #tpu.memory_space<vmem>>, %arg4: memref<2x4x8x128xf32, #tpu.memory_space<vmem>>, %arg5: memref<2x4x8x128xf32, #tpu.memory_space<vmem>>, %arg6: memref<2x4x8x128xf32, #tpu.memory_space<vmem>>, %arg7: memref<8x128xf32, #tpu.memory_space<vmem>>) attributes {dimension_semantics = [#tpu.dimension_semantics<parallel>, #tpu.dimension_semantics<arbitrary>], iteration_bounds = array<i64: 1, 1>, scalar_prefetch = 0 : i64, scratch_operands = 0 : i64, tpu.core_type = #tpu.core_type<tc>, window_params = [{transform_indices = @transform_0, window_bounds = array<i64: 2, 4, 8, 128>}, {transform_indices = @transform_1, window_bounds = array<i64: 2, 1, 8, 128>}, {transform_indices = @transform_2, window_bounds = array<i64: 2, 4, 8, 128>}, {transform_indices = @transform_3, window_bounds = array<i64: 2, 4, 8, 128>}, {transform_indices = @transform_4, window_bounds = array<i64: 2, 4, 8, 128>}, {transform_indices = @transform_5, window_bounds = array<i64: 8, 128>}]} {
    %c0_i32 = arith.constant 0 : i32
    %0 = arith.cmpi eq, %arg1, %c0_i32 : i32
    %1 = arith.extui %0 : i1 to i32
    %c0_i32_0 = arith.constant 0 : i32
    %2 = arith.cmpi ne, %1, %c0_i32_0 : i32
    scf.if %2 {
      %cst_44 = arith.constant 0.000000e+00 : f32
      %48 = vector.broadcast %cst_44 : f32 to vector<2x4x8x128xf32>
      %c0_45 = arith.constant 0 : index
      %c0_46 = arith.constant 0 : index
      %c0_47 = arith.constant 0 : index
      %c0_48 = arith.constant 0 : index
      %49 = vector.load %arg4[%c0_45, %c0_46, %c0_47, %c0_48] : memref<2x4x8x128xf32, #tpu.memory_space<vmem>>, vector<2x4x8x128xf32>
      tpu.vector_store %arg4[%c0_45, %c0_46, %c0_47, %c0_48], %48 {strides = array<i32>} : memref<2x4x8x128xf32, #tpu.memory_space<vmem>>, vector<2x4x8x128xf32>,
      %cst_49 = arith.constant 0.000000e+00 : f32
      %50 = vector.broadcast %cst_49 : f32 to vector<2x4x8x128xf32>
      %c0_50 = arith.constant 0 : index
      %c0_51 = arith.constant 0 : index
      %c0_52 = arith.constant 0 : index
      %c0_53 = arith.constant 0 : index
      %51 = vector.load %arg5[%c0_50, %c0_51, %c0_52, %c0_53] : memref<2x4x8x128xf32, #tpu.memory_space<vmem>>, vector<2x4x8x128xf32>
      tpu.vector_store %arg5[%c0_50, %c0_51, %c0_52, %c0_53], %50 {strides = array<i32>} : memref<2x4x8x128xf32, #tpu.memory_space<vmem>>, vector<2x4x8x128xf32>,
      %cst_54 = arith.constant 0.000000e+00 : f32
      %52 = vector.broadcast %cst_54 : f32 to vector<2x4x8x128xf32>
      %c0_55 = arith.constant 0 : index
      %c0_56 = arith.constant 0 : index
      %c0_57 = arith.constant 0 : index
      %c0_58 = arith.constant 0 : index
      %53 = vector.load %arg6[%c0_55, %c0_56, %c0_57, %c0_58] : memref<2x4x8x128xf32, #tpu.memory_space<vmem>>, vector<2x4x8x128xf32>
      tpu.vector_store %arg6[%c0_55, %c0_56, %c0_57, %c0_58], %52 {strides = array<i32>} : memref<2x4x8x128xf32, #tpu.memory_space<vmem>>, vector<2x4x8x128xf32>,
      %cst_59 = arith.constant 0.000000e+00 : f32
      %54 = vector.broadcast %cst_59 : f32 to vector<8x128xf32>
      %c0_60 = arith.constant 0 : index
      %c0_61 = arith.constant 0 : index
      %55 = vector.load %arg7[%c0_60, %c0_61] : memref<8x128xf32, #tpu.memory_space<vmem>>, vector<8x128xf32>
      tpu.vector_store %arg7[%c0_60, %c0_61], %54 {strides = array<i32>} : memref<8x128xf32, #tpu.memory_space<vmem>>, vector<8x128xf32>,
    } else {
    }
    %c0 = arith.constant 0 : index
    %c0_1 = arith.constant 0 : index
    %c0_2 = arith.constant 0 : index
    %c0_3 = arith.constant 0 : index
    %3 = vector.load %arg2[%c0, %c0_1, %c0_2, %c0_3] : memref<2x4x8x128xf32, #tpu.memory_space<vmem>>, vector<2x4x8x128xf32>
    %c0_4 = arith.constant 0 : index
    %c0_5 = arith.constant 0 : index
    %c0_6 = arith.constant 0 : index
    %c0_7 = arith.constant 0 : index
    %4 = vector.load %arg3[%c0_4, %c0_5, %c0_6, %c0_7] : memref<2x1x8x128xi8, #tpu.memory_space<vmem>>, vector<2x1x8x128xi8>
    %5 = arith.extsi %4 : vector<2x1x8x128xi8> to vector<2x1x8x128xi32>
    %cst = arith.constant dense<0xFF800000> : vector<2x8x128xf32>
    %6 = vector.multi_reduction <maximumf>, %3, %cst [1] : vector<2x4x8x128xf32> to vector<2x8x128xf32>
    %7 = vector.shape_cast %6 : vector<2x8x128xf32> to vector<2x1x8x128xf32>
    %8 = vector.broadcast %7 : vector<2x1x8x128xf32> to vector<2x4x8x128xf32>
    %9 = arith.subf %3, %8 : vector<2x4x8x128xf32>
    %10 = math.exp %9 : vector<2x4x8x128xf32>
    %cst_8 = arith.constant dense<0.000000e+00> : vector<2x8x128xf32>
    %11 = vector.multi_reduction <add>, %10, %cst_8 [1] : vector<2x4x8x128xf32> to vector<2x8x128xf32>
    %12 = vector.shape_cast %11 : vector<2x8x128xf32> to vector<2x1x8x128xf32>
    %13 = tpu.reciprocal %12 {approx = true} : vector<2x1x8x128xf32> -> vector<2x1x8x128xf32>
    %14 = vector.broadcast %13 : vector<2x1x8x128xf32> to vector<2x4x8x128xf32>
    %15 = arith.mulf %10, %14 : vector<2x4x8x128xf32>
    %16 = tpu.iota {dimensions = array<i32: 1>} : vector<2x4x8x128xi32>
    %17 = vector.broadcast %5 : vector<2x1x8x128xi32> to vector<2x4x8x128xi32>
    %18 = arith.cmpi eq, %16, %17 : vector<2x4x8x128xi32>
    %cst_9 = arith.constant 1.000000e+00 : f32
    %cst_10 = arith.constant 0.000000e+00 : f32
    %19 = vector.broadcast %cst_9 : f32 to vector<2x4x8x128xf32>
    %20 = vector.broadcast %cst_10 : f32 to vector<2x4x8x128xf32>
    %21 = arith.select %18, %19, %20 : vector<2x4x8x128xi1>, vector<2x4x8x128xf32>
    %c0_11 = arith.constant 0 : index
    %c0_12 = arith.constant 0 : index
    %c0_13 = arith.constant 0 : index
    %c0_14 = arith.constant 0 : index
    %22 = vector.load %arg4[%c0_11, %c0_12, %c0_13, %c0_14] : memref<2x4x8x128xf32, #tpu.memory_space<vmem>>, vector<2x4x8x128xf32>
    %23 = arith.mulf %15, %21 : vector<2x4x8x128xf32>
    %24 = vector.shape_cast %23 : vector<2x4x8x128xf32> to vector<2x4x1x8x128xf32>
    %cst_15 = arith.constant dense<0.000000e+00> : vector<2x4x8x128xf32>
    %25 = vector.multi_reduction <add>, %24, %cst_15 [2] : vector<2x4x1x8x128xf32> to vector<2x4x8x128xf32>
    %26 = arith.addf %22, %25 : vector<2x4x8x128xf32>
    %c0_16 = arith.constant 0 : index
    %c0_17 = arith.constant 0 : index
    %c0_18 = arith.constant 0 : index
    %c0_19 = arith.constant 0 : index
    %27 = vector.load %arg4[%c0_16, %c0_17, %c0_18, %c0_19] : memref<2x4x8x128xf32, #tpu.memory_space<vmem>>, vector<2x4x8x128xf32>
    tpu.vector_store %arg4[%c0_16, %c0_17, %c0_18, %c0_19], %26 {strides = array<i32>} : memref<2x4x8x128xf32, #tpu.memory_space<vmem>>, vector<2x4x8x128xf32>,
    %c0_20 = arith.constant 0 : index
    %c0_21 = arith.constant 0 : index
    %c0_22 = arith.constant 0 : index
    %c0_23 = arith.constant 0 : index
    %28 = vector.load %arg5[%c0_20, %c0_21, %c0_22, %c0_23] : memref<2x4x8x128xf32, #tpu.memory_space<vmem>>, vector<2x4x8x128xf32>
    %29 = vector.shape_cast %15 : vector<2x4x8x128xf32> to vector<2x4x1x8x128xf32>
    %cst_24 = arith.constant dense<0.000000e+00> : vector<2x4x8x128xf32>
    %30 = vector.multi_reduction <add>, %29, %cst_24 [2] : vector<2x4x1x8x128xf32> to vector<2x4x8x128xf32>
    %31 = arith.addf %28, %30 : vector<2x4x8x128xf32>
    %c0_25 = arith.constant 0 : index
    %c0_26 = arith.constant 0 : index
    %c0_27 = arith.constant 0 : index
    %c0_28 = arith.constant 0 : index
    %32 = vector.load %arg5[%c0_25, %c0_26, %c0_27, %c0_28] : memref<2x4x8x128xf32, #tpu.memory_space<vmem>>, vector<2x4x8x128xf32>
    tpu.vector_store %arg5[%c0_25, %c0_26, %c0_27, %c0_28], %31 {strides = array<i32>} : memref<2x4x8x128xf32, #tpu.memory_space<vmem>>, vector<2x4x8x128xf32>,
    %c0_29 = arith.constant 0 : index
    %c0_30 = arith.constant 0 : index
    %c0_31 = arith.constant 0 : index
    %c0_32 = arith.constant 0 : index
    %33 = vector.load %arg6[%c0_29, %c0_30, %c0_31, %c0_32] : memref<2x4x8x128xf32, #tpu.memory_space<vmem>>, vector<2x4x8x128xf32>
    %34 = vector.shape_cast %21 : vector<2x4x8x128xf32> to vector<2x4x1x8x128xf32>
    %cst_33 = arith.constant dense<0.000000e+00> : vector<2x4x8x128xf32>
    %35 = vector.multi_reduction <add>, %34, %cst_33 [2] : vector<2x4x1x8x128xf32> to vector<2x4x8x128xf32>
    %36 = arith.addf %33, %35 : vector<2x4x8x128xf32>
    %c0_34 = arith.constant 0 : index
    %c0_35 = arith.constant 0 : index
    %c0_36 = arith.constant 0 : index
    %c0_37 = arith.constant 0 : index
    %37 = vector.load %arg6[%c0_34, %c0_35, %c0_36, %c0_37] : memref<2x4x8x128xf32, #tpu.memory_space<vmem>>, vector<2x4x8x128xf32>
    tpu.vector_store %arg6[%c0_34, %c0_35, %c0_36, %c0_37], %36 {strides = array<i32>} : memref<2x4x8x128xf32, #tpu.memory_space<vmem>>, vector<2x4x8x128xf32>,
    %38 = arith.mulf %9, %21 : vector<2x4x8x128xf32>
    %cst_38 = arith.constant dense<0.000000e+00> : vector<2x8x128xf32>
    %39 = vector.multi_reduction <add>, %38, %cst_38 [1] : vector<2x4x8x128xf32> to vector<2x8x128xf32>
    %40 = math.log %12 : vector<2x1x8x128xf32>
    %41 = vector.shape_cast %40 : vector<2x1x8x128xf32> to vector<2x8x128xf32>
    %42 = arith.subf %41, %39 : vector<2x8x128xf32>
    %c0_39 = arith.constant 0 : index
    %c0_40 = arith.constant 0 : index
    %43 = vector.load %arg7[%c0_39, %c0_40] : memref<8x128xf32, #tpu.memory_space<vmem>>, vector<8x128xf32>
    %44 = vector.shape_cast %42 : vector<2x8x128xf32> to vector<2x1x8x128xf32>
    %cst_41 = arith.constant dense<0.000000e+00> : vector<8x128xf32>
    %45 = vector.multi_reduction <add>, %44, %cst_41 [0, 1] : vector<2x1x8x128xf32> to vector<8x128xf32>
    %46 = arith.addf %43, %45 : vector<8x128xf32>
    %c0_42 = arith.constant 0 : index
    %c0_43 = arith.constant 0 : index
    %47 = vector.load %arg7[%c0_42, %c0_43] : memref<8x128xf32, #tpu.memory_space<vmem>>, vector<8x128xf32>
    tpu.vector_store %arg7[%c0_42, %c0_43], %46 {strides = array<i32>} : memref<8x128xf32, #tpu.memory_space<vmem>>, vector<8x128xf32>,
    return
  }
  func.func @transform_0(%arg0: i32, %arg1: i32) -> (i32, i32, i32, i32) {
    %c1_i32 = arith.constant 1 : i32
    %0 = arith.muli %arg0, %c1_i32 : i32
    %1 = arith.addi %0, %arg1 : i32
    %c0_i32 = arith.constant 0 : i32
    %c0_i32_0 = arith.constant 0 : i32
    %c0_i32_1 = arith.constant 0 : i32
    %c0_i32_2 = arith.constant 0 : i32
    return %c0_i32, %c0_i32_0, %1, %c0_i32_1 : i32, i32, i32, i32
  }
  func.func @transform_1(%arg0: i32, %arg1: i32) -> (i32, i32, i32, i32) {
    %c1_i32 = arith.constant 1 : i32
    %0 = arith.muli %arg0, %c1_i32 : i32
    %1 = arith.addi %0, %arg1 : i32
    %c0_i32 = arith.constant 0 : i32
    %c0_i32_0 = arith.constant 0 : i32
    %c0_i32_1 = arith.constant 0 : i32
    %c0_i32_2 = arith.constant 0 : i32
    return %c0_i32, %c0_i32_0, %1, %c0_i32_1 : i32, i32, i32, i32
  }
  func.func @transform_2(%arg0: i32, %arg1: i32) -> (i32, i32, i32, i32) {
    %c0_i32 = arith.constant 0 : i32
    %c0_i32_0 = arith.constant 0 : i32
    %c0_i32_1 = arith.constant 0 : i32
    %c0_i32_2 = arith.constant 0 : i32
    return %arg0, %c0_i32, %c0_i32_0, %c0_i32_1 : i32, i32, i32, i32
  }
  func.func @transform_3(%arg0: i32, %arg1: i32) -> (i32, i32, i32, i32) {
    %c0_i32 = arith.constant 0 : i32
    %c0_i32_0 = arith.constant 0 : i32
    %c0_i32_1 = arith.constant 0 : i32
    %c0_i32_2 = arith.constant 0 : i32
    return %arg0, %c0_i32, %c0_i32_0, %c0_i32_1 : i32, i32, i32, i32
  }
  func.func @transform_4(%arg0: i32, %arg1: i32) -> (i32, i32, i32, i32) {
    %c0_i32 = arith.constant 0 : i32
    %c0_i32_0 = arith.constant 0 : i32
    %c0_i32_1 = arith.constant 0 : i32
    %c0_i32_2 = arith.constant 0 : i32
    return %arg0, %c0_i32, %c0_i32_0, %c0_i32_1 : i32, i32, i32, i32
  }
  func.func @transform_5(%arg0: i32, %arg1: i32) -> (i32, i32) {
    %c0_i32 = arith.constant 0 : i32
    %c0_i32_0 = arith.constant 0 : i32
    return %arg0, %c0_i32 : i32, i32
  }
}

</mosaic_0001>

<llo_original>
// kernel: dc_and_ce_loss.1
$region0: #{dc_and_ce_loss.1}
  #allocation0 [shape = 'u32[]', space=smem, size = 0x4, offset = 0x4, fixed_abs, tag = 'smem constant byte address 0x4 - core index']
  #allocation1 [shape = 'u32[144,128]{1,0:T(1,128)}', space=vmem, size = 0x12000, scoped, tag = 'internal scratch']
  %s0 = inlined_call_operand.vmem [shape: f32[2,4,8,128], index: 0, kind: input, shape index: {}]
  %s1 = inlined_call_operand.vmem [shape: s8[2,1,8,128], index: 1, kind: input, shape index: {}]
  %s2 = inlined_call_operand.vmem [shape: f32[2,4,8,128], index: 2, kind: output, shape index: {0}]
  %s3 = inlined_call_operand.vmem [shape: f32[2,4,8,128], index: 3, kind: output, shape index: {1}]
  %s4 = inlined_call_operand.vmem [shape: f32[2,4,8,128], index: 4, kind: output, shape index: {2}]
  %s5 = inlined_call_operand.vmem [shape: f32[8,128], index: 5, kind: output, shape index: {3}]
  %6 = xla_tuple %s2, %s3, %s4, %s5
  %s7 = sld [smem:[#allocation0]]
  $region46: #{dc_and_ce_loss.1} parent=0
    _
  %s9 = ssub.s32 1, %s7
  %s10 = scalar_select 0, %s9, %s7
  // Predicated region
  $region2: #{dc_and_ce_loss.1} parent=0 // pred_check
    _
  $region3: #{dc_and_ce_loss.1} parent=0 // pred_check_branch
    %12 = sbr.rel (0) target = $region5
  $region4: #{dc_and_ce_loss.1} parent=0 // pred_region
    %s13 = sadd.s32 0, 0
    %p14 = scmp.lt.s32.totalorder %s13, 0
    %s15 = scalar_select %p14, %s13, 0
    %s16 = smul.addr %s15, 8
    %s17 = scalar_lea.vmem %s0, %s16
    %s18 = sadd.s32 0, 0
  $region5: #{dc_and_ce_loss.1} parent=0 // pred_fallthru
    _
  // Predicated region
  $region6: #{dc_and_ce_loss.1} parent=0 // pred_check
    _
  $region7: #{dc_and_ce_loss.1} parent=0 // pred_check_branch
    %20 = sbr.rel (0) target = $region9
  $region8: #{dc_and_ce_loss.1} parent=0 // pred_region
    %s21 = sadd.s32 0, 0
    %p22 = scmp.lt.s32.totalorder %s21, 0
    %s23 = scalar_select %p22, %s21, 0
    %s24 = smul.addr %s23, 2
    %s25 = scalar_lea.vmem %s1, %s24
    %s26 = sadd.s32 0, 0
  $region9: #{dc_and_ce_loss.1} parent=0 // pred_fallthru
    _
  %s27 = sadd.s32 0, 0
  %p28 = scmp.lt.s32.totalorder %s27, 0
  %s29 = scalar_select %p28, %s27, 0
  %s30 = smul.addr %s29, 8
  %s31 = scalar_lea.vmem %s0, %s30
  %s32 = sadd.s32 0, 0
  %p33 = scmp.lt.s32.totalorder %s32, 0
  %s34 = scalar_select %p33, %s32, 0
  %s35 = smul.addr %s34, 2
  %s36 = scalar_lea.vmem %s1, %s35
  %s37 = sadd.s32 0, 0
  %p38 = scmp.lt.s32.totalorder %s37, 0
  %s39 = scalar_select %p38, %s37, 0
  %s40 = smul.addr %s39, 8
  %s41 = scalar_lea.vmem %s0, %s40
  %s42 = sadd.s32 0, 0
  %s43 = sadd.s32 0, 0
  %p44 = scmp.lt.s32.totalorder %s43, 0
  %s45 = scalar_select %p44, %s43, 0
  %s46 = smul.addr %s45, 2
  %s47 = scalar_lea.vmem %s1, %s46
  %s48 = sadd.s32 0, 0
  %p49 = scmp.eq.s32.totalorder 0, 0
  // Predicated region
  $region10: #{dc_and_ce_loss.1} parent=0 // pred_check
    %p50 = pneg %p49
  $region11: #{dc_and_ce_loss.1} parent=0 // pred_check_branch
    %52 = sbr.rel (%p50) target = $region13
  $region12: #{dc_and_ce_loss.1} parent=0 // pred_region
    %53 = vst [vmem:[%s2] sm:$0xff] 0.0
    %54 = vst [vmem:[%s2 + $0x8] sm:$0xff] 0.0
    %55 = vst [vmem:[%s2 + $0x10] sm:$0xff] 0.0
    %56 = vst [vmem:[%s2 + $0x18] sm:$0xff] 0.0
    %57 = vst [vmem:[%s2 + $0x20] sm:$0xff] 0.0
    %58 = vst [vmem:[%s2 + $0x28] sm:$0xff] 0.0
    %59 = vst [vmem:[%s2 + $0x30] sm:$0xff] 0.0
    %60 = vst [vmem:[%s2 + $0x38] sm:$0xff] 0.0
    %61 = vst [vmem:[%s3] sm:$0xff] 0.0
    %62 = vst [vmem:[%s3 + $0x8] sm:$0xff] 0.0
    %63 = vst [vmem:[%s3 + $0x10] sm:$0xff] 0.0
    %64 = vst [vmem:[%s3 + $0x18] sm:$0xff] 0.0
    %65 = vst [vmem:[%s3 + $0x20] sm:$0xff] 0.0
    %66 = vst [vmem:[%s3 + $0x28] sm:$0xff] 0.0
    %67 = vst [vmem:[%s3 + $0x30] sm:$0xff] 0.0
    %68 = vst [vmem:[%s3 + $0x38] sm:$0xff] 0.0
    %69 = vst [vmem:[%s4] sm:$0xff] 0.0
    %70 = vst [vmem:[%s4 + $0x8] sm:$0xff] 0.0
    %71 = vst [vmem:[%s4 + $0x10] sm:$0xff] 0.0
    %72 = vst [vmem:[%s4 + $0x18] sm:$0xff] 0.0
    %73 = vst [vmem:[%s4 + $0x20] sm:$0xff] 0.0
    %74 = vst [vmem:[%s4 + $0x28] sm:$0xff] 0.0
    %75 = vst [vmem:[%s4 + $0x30] sm:$0xff] 0.0
    %76 = vst [vmem:[%s4 + $0x38] sm:$0xff] 0.0
    %77 = vst [vmem:[%s5] sm:$0xff] 0.0
  $region13: #{dc_and_ce_loss.1} parent=0 // pred_fallthru
    _
  %v78 = vld [vmem:[%s41] sm:$0xff]
  %v79 = vld [vmem:[%s41 + $0x8] sm:$0xff]
  %v80 = vld [vmem:[%s41 + $0x10] sm:$0xff]
  %v81 = vld [vmem:[%s41 + $0x18] sm:$0xff]
  %v82 = vld [vmem:[%s41 + $0x20] sm:$0xff]
  %v83 = vld [vmem:[%s41 + $0x28] sm:$0xff]
  %v84 = vld [vmem:[%s41 + $0x30] sm:$0xff]
  %v85 = vld [vmem:[%s41 + $0x38] sm:$0xff]
  %v86 = vld [vmem:[%s47] sm:$0x3]
  %v87 = vld [vmem:[%s47 + $0x2] sm:$0x3]
  %v88 = vunpack.c.0.s8 %v86
  %v89 = vunpack.c.0.s8 %v87
  %v90 = vmax.f32 %v78, %v80
  %v91 = vmax.f32 %v79, %v81
  %v92 = vmax.f32 %v90, %v91
  %v93 = vmax.f32 %v82, %v84
  %v94 = vmax.f32 %v83, %v85
  %v95 = vmax.f32 %v93, %v94
  %v96 = vsub.f32 %v78, %v92
  %v97 = vsub.f32 %v79, %v92
  %v98 = vsub.f32 %v80, %v92
  %v99 = vsub.f32 %v81, %v92
  %v100 = vsub.f32 %v82, %v95
  %v101 = vsub.f32 %v83, %v95
  %v102 = vsub.f32 %v84, %v95
  %v103 = vsub.f32 %v85, %v95
  %v104 = vmul.f32 %v96, 1.442695
  %v105 = vpow.pop %v104
  %v106 = vmul.f32 %v97, 1.442695
  %v107 = vpow.pop %v106
  %v108 = vmul.f32 %v98, 1.442695
  %v109 = vpow.pop %v108
  %v110 = vmul.f32 %v99, 1.442695
  %v111 = vpow.pop %v110
  %v112 = vmul.f32 %v100, 1.442695
  %v113 = vpow.pop %v112
  %v114 = vmul.f32 %v101, 1.442695
  %v115 = vpow.pop %v114
  %v116 = vmul.f32 %v102, 1.442695
  %v117 = vpow.pop %v116
  %v118 = vmul.f32 %v103, 1.442695
  %v119 = vpow.pop %v118
  %v120 = vadd.f32 %v105, %v107
  %v121 = vadd.f32 %v120, %v109
  %v122 = vadd.f32 %v121, %v111
  %v123 = vadd.f32 %v113, %v115
  %v124 = vadd.f32 %v123, %v117
  %v125 = vadd.f32 %v124, %v119
  %v126 = vrcp.pop %v122
  %v127 = vrcp.pop %v125
  %v128 = vmul.f32 %v105, %v126
  %v129 = vmul.f32 %v107, %v126
  %v130 = vmul.f32 %v109, %v126
  %v131 = vmul.f32 %v111, %v126
  %v132 = vmul.f32 %v113, %v127
  %v133 = vmul.f32 %v115, %v127
  %v134 = vmul.f32 %v117, %v127
  %v135 = vmul.f32 %v119, %v127
  %vm136 = vcmp.eq.s32.totalorder %v88, 0
  %vm137 = vcmp.eq.s32.totalorder %v88, 1
  %vm138 = vcmp.eq.s32.totalorder %v88, 2
  %vm139 = vcmp.eq.s32.totalorder %v88, 3
  %vm140 = vcmp.eq.s32.totalorder %v89, 0
  %vm141 = vcmp.eq.s32.totalorder %v89, 1
  %vm142 = vcmp.eq.s32.totalorder %v89, 2
  %vm143 = vcmp.eq.s32.totalorder %v89, 3
  %v144 = vsel %vm136, 1.0, 0.0
  %v145 = vsel %vm137, 1.0, 0.0
  %v146 = vsel %vm138, 1.0, 0.0
  %v147 = vsel %vm139, 1.0, 0.0
  %v148 = vsel %vm140, 1.0, 0.0
  %v149 = vsel %vm141, 1.0, 0.0
  %v150 = vsel %vm142, 1.0, 0.0
  %v151 = vsel %vm143, 1.0, 0.0
  %v152 = vld [vmem:[%s2] sm:$0xff]
  %v153 = vld [vmem:[%s2 + $0x8] sm:$0xff]
  %v154 = vld [vmem:[%s2 + $0x10] sm:$0xff]
  %v155 = vld [vmem:[%s2 + $0x18] sm:$0xff]
  %v156 = vld [vmem:[%s2 + $0x20] sm:$0xff]
  %v157 = vld [vmem:[%s2 + $0x28] sm:$0xff]
  %v158 = vld [vmem:[%s2 + $0x30] sm:$0xff]
  %v159 = vld [vmem:[%s2 + $0x38] sm:$0xff]
  %v160 = vmul.f32 %v128, %v144
  %v161 = vmul.f32 %v129, %v145
  %v162 = vmul.f32 %v130, %v146
  %v163 = vmul.f32 %v131, %v147
  %v164 = vmul.f32 %v132, %v148
  %v165 = vmul.f32 %v133, %v149
  %v166 = vmul.f32 %v134, %v150
  %v167 = vmul.f32 %v135, %v151
  %v168 = vadd.f32 %v160, 0.0
  %v169 = vadd.f32 %v161, 0.0
  %v170 = vadd.f32 %v162, 0.0
  %v171 = vadd.f32 %v163, 0.0
  %v172 = vadd.f32 %v164, 0.0
  %v173 = vadd.f32 %v165, 0.0
  %v174 = vadd.f32 %v166, 0.0
  %v175 = vadd.f32 %v167, 0.0
  %v176 = vadd.f32 %v152, %v168
  %v177 = vadd.f32 %v153, %v169
  %v178 = vadd.f32 %v154, %v170
  %v179 = vadd.f32 %v155, %v171
  %v180 = vadd.f32 %v156, %v172
  %v181 = vadd.f32 %v157, %v173
  %v182 = vadd.f32 %v158, %v174
  %v183 = vadd.f32 %v159, %v175
  %184 = vst [vmem:[%s2] sm:$0xff] %v176
  %185 = vst [vmem:[%s2 + $0x8] sm:$0xff] %v177
  %186 = vst [vmem:[%s2 + $0x10] sm:$0xff] %v178
  %187 = vst [vmem:[%s2 + $0x18] sm:$0xff] %v179
  %188 = vst [vmem:[%s2 + $0x20] sm:$0xff] %v180
  %189 = vst [vmem:[%s2 + $0x28] sm:$0xff] %v181
  %190 = vst [vmem:[%s2 + $0x30] sm:$0xff] %v182
  %191 = vst [vmem:[%s2 + $0x38] sm:$0xff] %v183
  %v192 = vld [vmem:[%s3] sm:$0xff]
  %v193 = vld [vmem:[%s3 + $0x8] sm:$0xff]
  %v194 = vld [vmem:[%s3 + $0x10] sm:$0xff]
  %v195 = vld [vmem:[%s3 + $0x18] sm:$0xff]
  %v196 = vld [vmem:[%s3 + $0x20] sm:$0xff]
  %v197 = vld [vmem:[%s3 + $0x28] sm:$0xff]
  %v198 = vld [vmem:[%s3 + $0x30] sm:$0xff]
  %v199 = vld [vmem:[%s3 + $0x38] sm:$0xff]
  %v200 = vadd.f32 %v128, 0.0
  %v201 = vadd.f32 %v129, 0.0
  %v202 = vadd.f32 %v130, 0.0
  %v203 = vadd.f32 %v131, 0.0
  %v204 = vadd.f32 %v132, 0.0
  %v205 = vadd.f32 %v133, 0.0
  %v206 = vadd.f32 %v134, 0.0
  %v207 = vadd.f32 %v135, 0.0
  %v208 = vadd.f32 %v192, %v200
  %v209 = vadd.f32 %v193, %v201
  %v210 = vadd.f32 %v194, %v202
  %v211 = vadd.f32 %v195, %v203
  %v212 = vadd.f32 %v196, %v204
  %v213 = vadd.f32 %v197, %v205
  %v214 = vadd.f32 %v198, %v206
  %v215 = vadd.f32 %v199, %v207
  %216 = vst [vmem:[%s3] sm:$0xff] %v208
  %217 = vst [vmem:[%s3 + $0x8] sm:$0xff] %v209
  %218 = vst [vmem:[%s3 + $0x10] sm:$0xff] %v210
  %219 = vst [vmem:[%s3 + $0x18] sm:$0xff] %v211
  %220 = vst [vmem:[%s3 + $0x20] sm:$0xff] %v212
  %221 = vst [vmem:[%s3 + $0x28] sm:$0xff] %v213
  %222 = vst [vmem:[%s3 + $0x30] sm:$0xff] %v214
  %223 = vst [vmem:[%s3 + $0x38] sm:$0xff] %v215
  %v224 = vld [vmem:[%s4] sm:$0xff]
  %v225 = vld [vmem:[%s4 + $0x8] sm:$0xff]
  %v226 = vld [vmem:[%s4 + $0x10] sm:$0xff]
  %v227 = vld [vmem:[%s4 + $0x18] sm:$0xff]
  %v228 = vld [vmem:[%s4 + $0x20] sm:$0xff]
  %v229 = vld [vmem:[%s4 + $0x28] sm:$0xff]
  %v230 = vld [vmem:[%s4 + $0x30] sm:$0xff]
  %v231 = vld [vmem:[%s4 + $0x38] sm:$0xff]
  %v232 = vadd.f32 %v144, 0.0
  %v233 = vadd.f32 %v145, 0.0
  %v234 = vadd.f32 %v146, 0.0
  %v235 = vadd.f32 %v147, 0.0
  %v236 = vadd.f32 %v148, 0.0
  %v237 = vadd.f32 %v149, 0.0
  %v238 = vadd.f32 %v150, 0.0
  %v239 = vadd.f32 %v151, 0.0
  %v240 = vadd.f32 %v224, %v232
  %v241 = vadd.f32 %v225, %v233
  %v242 = vadd.f32 %v226, %v234
  %v243 = vadd.f32 %v227, %v235
  %v244 = vadd.f32 %v228, %v236
  %v245 = vadd.f32 %v229, %v237
  %v246 = vadd.f32 %v230, %v238
  %v247 = vadd.f32 %v231, %v239
  %248 = vst [vmem:[%s4] sm:$0xff] %v240
  %249 = vst [vmem:[%s4 + $0x8] sm:$0xff] %v241
  %250 = vst [vmem:[%s4 + $0x10] sm:$0xff] %v242
  %251 = vst [vmem:[%s4 + $0x18] sm:$0xff] %v243
  %252 = vst [vmem:[%s4 + $0x20] sm:$0xff] %v244
  %253 = vst [vmem:[%s4 + $0x28] sm:$0xff] %v245
  %254 = vst [vmem:[%s4 + $0x30] sm:$0xff] %v246
  %255 = vst [vmem:[%s4 + $0x38] sm:$0xff] %v247
  %v256 = vmul.f32 %v96, %v144
  %v257 = vmul.f32 %v97, %v145
  %v258 = vmul.f32 %v98, %v146
  %v259 = vmul.f32 %v99, %v147
  %v260 = vmul.f32 %v100, %v148
  %v261 = vmul.f32 %v101, %v149
  %v262 = vmul.f32 %v102, %v150
  %v263 = vmul.f32 %v103, %v151
  %v264 = vadd.f32 %v256, %v257
  %v265 = vadd.f32 %v264, %v258
  %v266 = vadd.f32 %v265, %v259
  %v267 = vadd.f32 %v260, %v261
  %v268 = vadd.f32 %v267, %v262
  %v269 = vadd.f32 %v268, %v263
  %v270 = vlog2.pop %v122
  %v271 = vmul.f32 %v270, 0.6931472
  %v272 = vlog2.pop %v125
  %v273 = vmul.f32 %v272, 0.6931472
  %v274 = vsub.f32 %v271, %v266
  %v275 = vsub.f32 %v273, %v269
  %v276 = vld [vmem:[%s5] sm:$0xff]
  %v277 = vadd.f32 %v274, %v275
  %v278 = vadd.f32 %v276, %v277
  %279 = vst [vmem:[%s5] sm:$0xff] %v278
  // Predicated region
  $region14: #{dc_and_ce_loss.1} parent=0 // pred_check
    _
  $region15: #{dc_and_ce_loss.1} parent=0 // pred_check_branch
    %281 = sbr.rel (0) target = $region17
  $region16: #{dc_and_ce_loss.1} parent=0 // pred_region
    _
  $region17: #{dc_and_ce_loss.1} parent=0 // pred_fallthru
    _
  // Predicated region
  $region18: #{dc_and_ce_loss.1} parent=0 // pred_check
    _
  $region19: #{dc_and_ce_loss.1} parent=0 // pred_check_branch
    %283 = sbr.rel (0) target = $region21
  $region20: #{dc_and_ce_loss.1} parent=0 // pred_region
    _
  $region21: #{dc_and_ce_loss.1} parent=0 // pred_fallthru
    _
  // Predicated region
  $region22: #{dc_and_ce_loss.1} parent=0 // pred_check
    _
  $region23: #{dc_and_ce_loss.1} parent=0 // pred_check_branch
    %285 = sbr.rel (0) target = $region25
  $region24: #{dc_and_ce_loss.1} parent=0 // pred_region
    _
  $region25: #{dc_and_ce_loss.1} parent=0 // pred_fallthru
    _
  // Predicated region
  $region26: #{dc_and_ce_loss.1} parent=0 // pred_check
    _
  $region27: #{dc_and_ce_loss.1} parent=0 // pred_check_branch
    %287 = sbr.rel (0) target = $region29
  $region28: #{dc_and_ce_loss.1} parent=0 // pred_region
    _
  $region29: #{dc_and_ce_loss.1} parent=0 // pred_fallthru
    _
  // Predicated region
  $region30: #{dc_and_ce_loss.1} parent=0 // pred_check
    _
  $region31: #{dc_and_ce_loss.1} parent=0 // pred_check_branch
    %289 = sbr.rel (0) target = $region33
  $region32: #{dc_and_ce_loss.1} parent=0 // pred_region
    _
  $region33: #{dc_and_ce_loss.1} parent=0 // pred_fallthru
    _
  // Predicated region
  $region34: #{dc_and_ce_loss.1} parent=0 // pred_check
    _
  $region35: #{dc_and_ce_loss.1} parent=0 // pred_check_branch
    %291 = sbr.rel (0) target = $region37
  $region36: #{dc_and_ce_loss.1} parent=0 // pred_region
    _
  $region37: #{dc_and_ce_loss.1} parent=0 // pred_fallthru
    _
  // Predicated region
  $region38: #{dc_and_ce_loss.1} parent=0 // pred_check
    _
  $region39: #{dc_and_ce_loss.1} parent=0 // pred_check_branch
    %293 = sbr.rel (0) target = $region41
  $region40: #{dc_and_ce_loss.1} parent=0 // pred_region
    _
  $region41: #{dc_and_ce_loss.1} parent=0 // pred_fallthru
    _
  // Predicated region
  $region42: #{dc_and_ce_loss.1} parent=0 // pred_check
    _
  $region43: #{dc_and_ce_loss.1} parent=0 // pred_check_branch
    %295 = sbr.rel (0) target = $region45
  $region44: #{dc_and_ce_loss.1} parent=0 // pred_region
    _
  $region45: #{dc_and_ce_loss.1} parent=0 // pred_fallthru
    _

</llo_original>
